<compile_context>
chip_gen: v6e
topology: v6e:2x2x1
jax: 0.10.0
libtpu: 0.0.40
codegen_flags: <defaults>
</compile_context>

<pallas_src>
import jax
import jax.numpy as jnp
from jax import lax
from jax.experimental import pallas as pl
from jax.experimental.pallas import tpu as pltpu

INPUT_SIZE = 4
HIDDEN_SIZE = 32
OUTPUT_SIZE = 1


def _make_lstm_kernel(T, T_pad, t_chunk, B, H, steps_per_slab, slab_rows):
    """Builds the chunked LSTM-recurrence kernel with static geometry closed over."""
    needs_mask = (T_pad != T)
    n_slabs = t_chunk // steps_per_slab

    def kernel(xproj_ref, whh_ref, h_out_ref, h_scr, c_scr):
        # xproj_ref: (t_chunk*B, 4H) — this chunk's precomputed x_t@W_ih^T + bias
        # whh_ref:   (H, 4H)         — W_hh^T
        # h_out_ref: (B, H)          — final hidden state h_T
        # h_scr/c_scr: (B, H) VMEM   — (h, c) carried across time chunks
        pid = pl.program_id(0)

        @pl.when(pid == 0)
        def _init():
            h_scr[...] = jnp.zeros_like(h_scr)
            c_scr[...] = jnp.zeros_like(c_scr)

        # Hoisted recurrent weight: one load, vreg-resident for every step.
        # (If this ever becomes the bottleneck, this is where
        #  pltpu.matmul_push_rhs(W) once + matmul_acc_lhs/pop per step would go.)
        W = whh_ref[...]

        h0 = h_scr[...]
        c0 = c_scr[...]

        def slab_step(s, carry):
            h, c = carry
            base = pl.multiple_of(s * slab_rows, slab_rows)   # 8-aligned start
            slab = xproj_ref[pl.ds(base, slab_rows), :]       # (slab_rows, 4H)
            for j in range(steps_per_slab):                   # static inner unroll
                xp = slab[j * B:(j + 1) * B, :]               # (B, 4H) value slice
                gates = xp + jnp.dot(h, W, preferred_element_type=jnp.float32)
                sg = jax.nn.sigmoid(gates)                    # one full-width sigmoid
                i_g = sg[:, 0 * H:1 * H]
                f_g = sg[:, 1 * H:2 * H]
                o_g = sg[:, 3 * H:4 * H]
                g_g = jnp.tanh(gates[:, 2 * H:3 * H])         # tanh only on g gate
                c_new = f_g * c + i_g * g_g
                h_new = o_g * jnp.tanh(c_new)
                if needs_mask:
                    # Only emitted when T was padded up to a multiple of t_chunk.
                    t_glob = pid * t_chunk + s * steps_per_slab + j
                    valid = t_glob < T
                    h_new = jnp.where(valid, h_new, h)
                    c_new = jnp.where(valid, c_new, c)
                h, c = h_new, c_new
            return h, c

        h_T, c_T = lax.fori_loop(0, n_slabs, slab_step, (h0, c0), unroll=2)

        h_scr[...] = h_T
        c_scr[...] = c_T

        @pl.when(pid == pl.num_programs(0) - 1)
        def _finalize():
            h_out_ref[...] = h_T

    return kernel


def lstm_model_forward(x, params, *, t_chunk_target=256):
    """x: (B, T, I) float32 (batch_first, like PyTorch). Returns (B, 1)."""
    B, T, I = x.shape
    H = params["w_hh"].shape[1]                                   # w_hh: (4H, H)

    # Hoisted input projection as one batched einsum (also does the
    # batch-first -> time-major reorder), then flattened to kill the 4x
    # sublane padding of a (T, B, 4H) layout.
    bias = params["b_ih"] + params["b_hh"]                        # (4H,)
    x_proj = jnp.einsum("bti,gi->tbg", x, params["w_ih"],
                        preferred_element_type=jnp.float32) + bias  # (T, B, 4H)
    x_proj = x_proj.reshape(T * B, 4 * H)                         # (T*B, 4H)

    # Slab geometry: keep every dynamic sublane offset 8-aligned inside the
    # kernel by loading 8-row slabs and statically slicing steps from them.
    if B % 8 == 0:
        steps_per_slab, slab_rows = 1, B
    else:
        assert 8 % B == 0, "batch size must divide 8 or be a multiple of 8"
        steps_per_slab, slab_rows = 8 // B, 8

    # Time-chunk grid: bounds per-block VMEM and restores double-buffered DMA
    # of the activation stream for long sequences.
    t_chunk = min(T, t_chunk_target)
    t_chunk = ((t_chunk + steps_per_slab - 1) // steps_per_slab) * steps_per_slab
    T_pad = ((T + t_chunk - 1) // t_chunk) * t_chunk
    if T_pad != T:
        x_proj = jnp.pad(x_proj, ((0, (T_pad - T) * B), (0, 0)))
    num_chunks = T_pad // t_chunk

    w_hh_t = params["w_hh"].T                                     # (H, 4H)

    kernel = _make_lstm_kernel(T, T_pad, t_chunk, B, H,
                               steps_per_slab, slab_rows)

    h_T = pl.pallas_call(
        kernel,
        out_shape=jax.ShapeDtypeStruct((B, H), jnp.float32),
        grid_spec=pltpu.PrefetchScalarGridSpec(
            num_scalar_prefetch=0,
            grid=(num_chunks,),
            in_specs=[
                pl.BlockSpec((t_chunk * B, 4 * H), lambda t: (t, 0)),
                pl.BlockSpec((H, 4 * H), lambda t: (0, 0)),
            ],
            out_specs=pl.BlockSpec((B, H), lambda t: (0, 0)),
            scratch_shapes=[
                pltpu.VMEM((B, H), jnp.float32),   # h carry
                pltpu.VMEM((B, H), jnp.float32),   # c carry
            ],
        ),
        compiler_params=pltpu.CompilerParams(
            dimension_semantics=("arbitrary",)),
    )(x_proj, w_hh_t)

    # Final Linear on the last hidden state (XLA: (B,32)x(32,1) is too narrow
    # to be worth a 1-lane masked store inside the kernel).
    return h_T @ params["w_out"].T + params["b_out"]


def init_params(key, input_size=INPUT_SIZE, hidden_size=HIDDEN_SIZE,
                output_size=OUTPUT_SIZE):
    """Deterministic init mimicking PyTorch's uniform(-1/sqrt(H), 1/sqrt(H))."""
    ks = jax.random.split(key, 6)
    bound = 1.0 / jnp.sqrt(hidden_size)
    u = lambda k, shape: jax.random.uniform(k, shape, jnp.float32, -bound, bound)
    return {
        "w_ih": u(ks[0], (4 * hidden_size, input_size)),
        "w_hh": u(ks[1], (4 * hidden_size, hidden_size)),
        "b_ih": u(ks[2], (4 * hidden_size,)),
        "b_hh": u(ks[3], (4 * hidden_size,)),
        "w_out": u(ks[4], (output_size, hidden_size)),
        "b_out": u(ks[5], (output_size,)),
    }


def reference_forward(x, params):
    """Pure-JAX reference of the PyTorch forward for validation."""
    B, T, I = x.shape
    H = params["w_hh"].shape[0] // 4

    def step(carry, x_t):
        h, c = carry
        gates = (x_t @ params["w_ih"].T + h @ params["w_hh"].T
                 + params["b_ih"] + params["b_hh"])
        i = jax.nn.sigmoid(gates[:, 0 * H:1 * H])
        f = jax.nn.sigmoid(gates[:, 1 * H:2 * H])
        g = jnp.tanh(gates[:, 2 * H:3 * H])
        o = jax.nn.sigmoid(gates[:, 3 * H:4 * H])
        c = f * c + i * g
        h = o * jnp.tanh(c)
        return (h, c), None

    h0 = jnp.zeros((B, H), jnp.float32)
    c0 = jnp.zeros((B, H), jnp.float32)
    (h_T, _), _ = jax.lax.scan(step, (h0, c0), jnp.transpose(x, (1, 0, 2)))
    return h_T @ params["w_out"].T + params["b_out"]


if __name__ == "__main__":
    key = jax.random.PRNGKey(0)
    k_param, k_x = jax.random.split(key)

    B, T = 2, 8
    x = jax.random.normal(k_x, (B, T, INPUT_SIZE), jnp.float32)
    params = init_params(k_param)

    out = jax.block_until_ready(lstm_model_forward(x, params))

    ref = reference_forward(x, params)
    assert out.shape == (B, OUTPUT_SIZE)
    assert jnp.allclose(out, ref, rtol=1e-4, atol=1e-4), (out, ref)

    print("KERNEL_OK")
</pallas_src>

<mosaic_0001>
module attributes {stable_mosaic.version = 11 : i64} {
  func.func @kernel(%arg0: i32, %arg1: memref<16x128xf32, #tpu.memory_space<vmem>>, %arg2: memref<32x128xf32, #tpu.memory_space<vmem>>, %arg3: memref<2x32xf32, #tpu.memory_space<vmem>>, %arg4: memref<2x32xf32, #tpu.memory_space<vmem>>, %arg5: memref<2x32xf32, #tpu.memory_space<vmem>>) attributes {dimension_semantics = [#tpu.dimension_semantics<arbitrary>], iteration_bounds = array<i64: 1>, scalar_prefetch = 0 : i64, scratch_operands = 2 : i64, tpu.core_type = #tpu.core_type<tc>, window_params = [{transform_indices = @transform_0, window_bounds = array<i64: 16, 128>}, {pipeline_mode = #tpu.pipeline_mode<synchronous>, transform_indices = @transform_1, window_bounds = array<i64: 32, 128>}, {pipeline_mode = #tpu.pipeline_mode<synchronous>, transform_indices = @transform_2, window_bounds = array<i64: 2, 32>}]} {
    %c0_i32 = arith.constant 0 : i32
    %0 = arith.cmpi eq, %arg0, %c0_i32 : i32
    %1 = arith.extui %0 : i1 to i32
    %c0_i32_0 = arith.constant 0 : i32
    %2 = arith.cmpi ne, %1, %c0_i32_0 : i32
    scf.if %2 {
      %cst_31 = arith.constant 0.000000e+00 : f32
      %163 = vector.broadcast %cst_31 : f32 to vector<2x32xf32>
      %c0_32 = arith.constant 0 : index
      %c0_33 = arith.constant 0 : index
      %164 = vector.load %arg4[%c0_32, %c0_33] : memref<2x32xf32, #tpu.memory_space<vmem>>, vector<2x32xf32>
      tpu.vector_store %arg4[%c0_32, %c0_33], %163 {strides = array<i32>} : memref<2x32xf32, #tpu.memory_space<vmem>>, vector<2x32xf32>,
      %cst_34 = arith.constant 0.000000e+00 : f32
      %165 = vector.broadcast %cst_34 : f32 to vector<2x32xf32>
      %c0_35 = arith.constant 0 : index
      %c0_36 = arith.constant 0 : index
      %166 = vector.load %arg5[%c0_35, %c0_36] : memref<2x32xf32, #tpu.memory_space<vmem>>, vector<2x32xf32>
      tpu.vector_store %arg5[%c0_35, %c0_36], %165 {strides = array<i32>} : memref<2x32xf32, #tpu.memory_space<vmem>>, vector<2x32xf32>,
    } else {
    }
    %c0 = arith.constant 0 : index
    %c0_1 = arith.constant 0 : index
    %3 = vector.load %arg2[%c0, %c0_1] : memref<32x128xf32, #tpu.memory_space<vmem>>, vector<32x128xf32>
    %c0_2 = arith.constant 0 : index
    %c0_3 = arith.constant 0 : index
    %4 = vector.load %arg4[%c0_2, %c0_3] : memref<2x32xf32, #tpu.memory_space<vmem>>, vector<2x32xf32>
    %c0_4 = arith.constant 0 : index
    %c0_5 = arith.constant 0 : index
    %5 = vector.load %arg5[%c0_4, %c0_5] : memref<2x32xf32, #tpu.memory_space<vmem>>, vector<2x32xf32>
    %c0_i32_6 = arith.constant 0 : i32
    %c8_i32 = arith.constant 8 : i32
    %6 = arith.muli %c0_i32_6, %c8_i32 : i32
    %7 = tpu.assume_multiple %6, 8 : i32
    %8 = arith.index_cast %7 : i32 to index
    %c0_7 = arith.constant 0 : index
    %9 = vector.load %arg1[%8, %c0_7] : memref<16x128xf32, #tpu.memory_space<vmem>>, vector<8x128xf32>
    %10 = vector.extract_strided_slice %9 {offsets = [0, 0], sizes = [2, 128], strides = [1, 1]} : vector<8x128xf32> to vector<2x128xf32>
    %cst = arith.constant dense<0.000000e+00> : vector<2x128xf32>
    %11 = tpu.matmul %4, %3, %cst {dimension_numbers = #tpu.dot_dimension_numbers<[1], [0], [0], [1], [0, 0, 1, 1], [], []>} : vector<2x32xf32>, vector<32x128xf32>, vector<2x128xf32> -> vector<2x128xf32>
    %12 = arith.addf %10, %11 : vector<2x128xf32>
    %13 = arith.negf %12 : vector<2x128xf32>
    %14 = math.exp %13 : vector<2x128xf32>
    %cst_8 = arith.constant 1.000000e+00 : f32
    %15 = vector.broadcast %cst_8 : f32 to vector<2x128xf32>
    %16 = arith.addf %15, %14 : vector<2x128xf32>
    %17 = arith.divf %15, %16 : vector<2x128xf32>
    %18 = vector.extract_strided_slice %17 {offsets = [0, 0], sizes = [2, 32], strides = [1, 1]} : vector<2x128xf32> to vector<2x32xf32>
    %19 = vector.extract_strided_slice %17 {offsets = [0, 32], sizes = [2, 32], strides = [1, 1]} : vector<2x128xf32> to vector<2x32xf32>
    %20 = vector.extract_strided_slice %17 {offsets = [0, 96], sizes = [2, 32], strides = [1, 1]} : vector<2x128xf32> to vector<2x32xf32>
    %21 = vector.extract_strided_slice %12 {offsets = [0, 64], sizes = [2, 32], strides = [1, 1]} : vector<2x128xf32> to vector<2x32xf32>
    %22 = math.tanh %21 : vector<2x32xf32>
    %23 = arith.mulf %19, %5 : vector<2x32xf32>
    %24 = arith.mulf %18, %22 : vector<2x32xf32>
    %25 = arith.addf %23, %24 : vector<2x32xf32>
    %26 = math.tanh %25 : vector<2x32xf32>
    %27 = arith.mulf %20, %26 : vector<2x32xf32>
    %28 = vector.extract_strided_slice %9 {offsets = [2, 0], sizes = [2, 128], strides = [1, 1]} : vector<8x128xf32> to vector<2x128xf32>
    %cst_9 = arith.constant dense<0.000000e+00> : vector<2x128xf32>
    %29 = tpu.matmul %27, %3, %cst_9 {dimension_numbers = #tpu.dot_dimension_numbers<[1], [0], [0], [1], [0, 0, 1, 1], [], []>} : vector<2x32xf32>, vector<32x128xf32>, vector<2x128xf32> -> vector<2x128xf32>
    %30 = arith.addf %28, %29 : vector<2x128xf32>
    %31 = arith.negf %30 : vector<2x128xf32>
    %32 = math.exp %31 : vector<2x128xf32>
    %cst_10 = arith.constant 1.000000e+00 : f32
    %33 = vector.broadcast %cst_10 : f32 to vector<2x128xf32>
    %34 = arith.addf %33, %32 : vector<2x128xf32>
    %35 = arith.divf %33, %34 : vector<2x128xf32>
    %36 = vector.extract_strided_slice %35 {offsets = [0, 0], sizes = [2, 32], strides = [1, 1]} : vector<2x128xf32> to vector<2x32xf32>
    %37 = vector.extract_strided_slice %35 {offsets = [0, 32], sizes = [2, 32], strides = [1, 1]} : vector<2x128xf32> to vector<2x32xf32>
    %38 = vector.extract_strided_slice %35 {offsets = [0, 96], sizes = [2, 32], strides = [1, 1]} : vector<2x128xf32> to vector<2x32xf32>
    %39 = vector.extract_strided_slice %30 {offsets = [0, 64], sizes = [2, 32], strides = [1, 1]} : vector<2x128xf32> to vector<2x32xf32>
    %40 = math.tanh %39 : vector<2x32xf32>
    %41 = arith.mulf %37, %25 : vector<2x32xf32>
    %42 = arith.mulf %36, %40 : vector<2x32xf32>
    %43 = arith.addf %41, %42 : vector<2x32xf32>
    %44 = math.tanh %43 : vector<2x32xf32>
    %45 = arith.mulf %38, %44 : vector<2x32xf32>
    %46 = vector.extract_strided_slice %9 {offsets = [4, 0], sizes = [2, 128], strides = [1, 1]} : vector<8x128xf32> to vector<2x128xf32>
    %cst_11 = arith.constant dense<0.000000e+00> : vector<2x128xf32>
    %47 = tpu.matmul %45, %3, %cst_11 {dimension_numbers = #tpu.dot_dimension_numbers<[1], [0], [0], [1], [0, 0, 1, 1], [], []>} : vector<2x32xf32>, vector<32x128xf32>, vector<2x128xf32> -> vector<2x128xf32>
    %48 = arith.addf %46, %47 : vector<2x128xf32>
    %49 = arith.negf %48 : vector<2x128xf32>
    %50 = math.exp %49 : vector<2x128xf32>
    %cst_12 = arith.constant 1.000000e+00 : f32
    %51 = vector.broadcast %cst_12 : f32 to vector<2x128xf32>
    %52 = arith.addf %51, %50 : vector<2x128xf32>
    %53 = arith.divf %51, %52 : vector<2x128xf32>
    %54 = vector.extract_strided_slice %53 {offsets = [0, 0], sizes = [2, 32], strides = [1, 1]} : vector<2x128xf32> to vector<2x32xf32>
    %55 = vector.extract_strided_slice %53 {offsets = [0, 32], sizes = [2, 32], strides = [1, 1]} : vector<2x128xf32> to vector<2x32xf32>
    %56 = vector.extract_strided_slice %53 {offsets = [0, 96], sizes = [2, 32], strides = [1, 1]} : vector<2x128xf32> to vector<2x32xf32>
    %57 = vector.extract_strided_slice %48 {offsets = [0, 64], sizes = [2, 32], strides = [1, 1]} : vector<2x128xf32> to vector<2x32xf32>
    %58 = math.tanh %57 : vector<2x32xf32>
    %59 = arith.mulf %55, %43 : vector<2x32xf32>
    %60 = arith.mulf %54, %58 : vector<2x32xf32>
    %61 = arith.addf %59, %60 : vector<2x32xf32>
    %62 = math.tanh %61 : vector<2x32xf32>
    %63 = arith.mulf %56, %62 : vector<2x32xf32>
    %64 = vector.extract_strided_slice %9 {offsets = [6, 0], sizes = [2, 128], strides = [1, 1]} : vector<8x128xf32> to vector<2x128xf32>
    %cst_13 = arith.constant dense<0.000000e+00> : vector<2x128xf32>
    %65 = tpu.matmul %63, %3, %cst_13 {dimension_numbers = #tpu.dot_dimension_numbers<[1], [0], [0], [1], [0, 0, 1, 1], [], []>} : vector<2x32xf32>, vector<32x128xf32>, vector<2x128xf32> -> vector<2x128xf32>
    %66 = arith.addf %64, %65 : vector<2x128xf32>
    %67 = arith.negf %66 : vector<2x128xf32>
    %68 = math.exp %67 : vector<2x128xf32>
    %cst_14 = arith.constant 1.000000e+00 : f32
    %69 = vector.broadcast %cst_14 : f32 to vector<2x128xf32>
    %70 = arith.addf %69, %68 : vector<2x128xf32>
    %71 = arith.divf %69, %70 : vector<2x128xf32>
    %72 = vector.extract_strided_slice %71 {offsets = [0, 0], sizes = [2, 32], strides = [1, 1]} : vector<2x128xf32> to vector<2x32xf32>
    %73 = vector.extract_strided_slice %71 {offsets = [0, 32], sizes = [2, 32], strides = [1, 1]} : vector<2x128xf32> to vector<2x32xf32>
    %74 = vector.extract_strided_slice %71 {offsets = [0, 96], sizes = [2, 32], strides = [1, 1]} : vector<2x128xf32> to vector<2x32xf32>
    %75 = vector.extract_strided_slice %66 {offsets = [0, 64], sizes = [2, 32], strides = [1, 1]} : vector<2x128xf32> to vector<2x32xf32>
    %76 = math.tanh %75 : vector<2x32xf32>
    %77 = arith.mulf %73, %61 : vector<2x32xf32>
    %78 = arith.mulf %72, %76 : vector<2x32xf32>
    %79 = arith.addf %77, %78 : vector<2x32xf32>
    %80 = math.tanh %79 : vector<2x32xf32>
    %81 = arith.mulf %74, %80 : vector<2x32xf32>
    %c1_i32 = arith.constant 1 : i32
    %c8_i32_15 = arith.constant 8 : i32
    %82 = arith.muli %c1_i32, %c8_i32_15 : i32
    %83 = tpu.assume_multiple %82, 8 : i32
    %84 = arith.index_cast %83 : i32 to index
    %c0_16 = arith.constant 0 : index
    %85 = vector.load %arg1[%84, %c0_16] : memref<16x128xf32, #tpu.memory_space<vmem>>, vector<8x128xf32>
    %86 = vector.extract_strided_slice %85 {offsets = [0, 0], sizes = [2, 128], strides = [1, 1]} : vector<8x128xf32> to vector<2x128xf32>
    %cst_17 = arith.constant dense<0.000000e+00> : vector<2x128xf32>
    %87 = tpu.matmul %81, %3, %cst_17 {dimension_numbers = #tpu.dot_dimension_numbers<[1], [0], [0], [1], [0, 0, 1, 1], [], []>} : vector<2x32xf32>, vector<32x128xf32>, vector<2x128xf32> -> vector<2x128xf32>
    %88 = arith.addf %86, %87 : vector<2x128xf32>
    %89 = arith.negf %88 : vector<2x128xf32>
    %90 = math.exp %89 : vector<2x128xf32>
    %cst_18 = arith.constant 1.000000e+00 : f32
    %91 = vector.broadcast %cst_18 : f32 to vector<2x128xf32>
    %92 = arith.addf %91, %90 : vector<2x128xf32>
    %93 = arith.divf %91, %92 : vector<2x128xf32>
    %94 = vector.extract_strided_slice %93 {offsets = [0, 0], sizes = [2, 32], strides = [1, 1]} : vector<2x128xf32> to vector<2x32xf32>
    %95 = vector.extract_strided_slice %93 {offsets = [0, 32], sizes = [2, 32], strides = [1, 1]} : vector<2x128xf32> to vector<2x32xf32>
    %96 = vector.extract_strided_slice %93 {offsets = [0, 96], sizes = [2, 32], strides = [1, 1]} : vector<2x128xf32> to vector<2x32xf32>
    %97 = vector.extract_strided_slice %88 {offsets = [0, 64], sizes = [2, 32], strides = [1, 1]} : vector<2x128xf32> to vector<2x32xf32>
    %98 = math.tanh %97 : vector<2x32xf32>
    %99 = arith.mulf %95, %79 : vector<2x32xf32>
    %100 = arith.mulf %94, %98 : vector<2x32xf32>
    %101 = arith.addf %99, %100 : vector<2x32xf32>
    %102 = math.tanh %101 : vector<2x32xf32>
    %103 = arith.mulf %96, %102 : vector<2x32xf32>
    %104 = vector.extract_strided_slice %85 {offsets = [2, 0], sizes = [2, 128], strides = [1, 1]} : vector<8x128xf32> to vector<2x128xf32>
    %cst_19 = arith.constant dense<0.000000e+00> : vector<2x128xf32>
    %105 = tpu.matmul %103, %3, %cst_19 {dimension_numbers = #tpu.dot_dimension_numbers<[1], [0], [0], [1], [0, 0, 1, 1], [], []>} : vector<2x32xf32>, vector<32x128xf32>, vector<2x128xf32> -> vector<2x128xf32>
    %106 = arith.addf %104, %105 : vector<2x128xf32>
    %107 = arith.negf %106 : vector<2x128xf32>
    %108 = math.exp %107 : vector<2x128xf32>
    %cst_20 = arith.constant 1.000000e+00 : f32
    %109 = vector.broadcast %cst_20 : f32 to vector<2x128xf32>
    %110 = arith.addf %109, %108 : vector<2x128xf32>
    %111 = arith.divf %109, %110 : vector<2x128xf32>
    %112 = vector.extract_strided_slice %111 {offsets = [0, 0], sizes = [2, 32], strides = [1, 1]} : vector<2x128xf32> to vector<2x32xf32>
    %113 = vector.extract_strided_slice %111 {offsets = [0, 32], sizes = [2, 32], strides = [1, 1]} : vector<2x128xf32> to vector<2x32xf32>
    %114 = vector.extract_strided_slice %111 {offsets = [0, 96], sizes = [2, 32], strides = [1, 1]} : vector<2x128xf32> to vector<2x32xf32>
    %115 = vector.extract_strided_slice %106 {offsets = [0, 64], sizes = [2, 32], strides = [1, 1]} : vector<2x128xf32> to vector<2x32xf32>
    %116 = math.tanh %115 : vector<2x32xf32>
    %117 = arith.mulf %113, %101 : vector<2x32xf32>
    %118 = arith.mulf %112, %116 : vector<2x32xf32>
    %119 = arith.addf %117, %118 : vector<2x32xf32>
    %120 = math.tanh %119 : vector<2x32xf32>
    %121 = arith.mulf %114, %120 : vector<2x32xf32>
    %122 = vector.extract_strided_slice %85 {offsets = [4, 0], sizes = [2, 128], strides = [1, 1]} : vector<8x128xf32> to vector<2x128xf32>
    %cst_21 = arith.constant dense<0.000000e+00> : vector<2x128xf32>
    %123 = tpu.matmul %121, %3, %cst_21 {dimension_numbers = #tpu.dot_dimension_numbers<[1], [0], [0], [1], [0, 0, 1, 1], [], []>} : vector<2x32xf32>, vector<32x128xf32>, vector<2x128xf32> -> vector<2x128xf32>
    %124 = arith.addf %122, %123 : vector<2x128xf32>
    %125 = arith.negf %124 : vector<2x128xf32>
    %126 = math.exp %125 : vector<2x128xf32>
    %cst_22 = arith.constant 1.000000e+00 : f32
    %127 = vector.broadcast %cst_22 : f32 to vector<2x128xf32>
    %128 = arith.addf %127, %126 : vector<2x128xf32>
    %129 = arith.divf %127, %128 : vector<2x128xf32>
    %130 = vector.extract_strided_slice %129 {offsets = [0, 0], sizes = [2, 32], strides = [1, 1]} : vector<2x128xf32> to vector<2x32xf32>
    %131 = vector.extract_strided_slice %129 {offsets = [0, 32], sizes = [2, 32], strides = [1, 1]} : vector<2x128xf32> to vector<2x32xf32>
    %132 = vector.extract_strided_slice %129 {offsets = [0, 96], sizes = [2, 32], strides = [1, 1]} : vector<2x128xf32> to vector<2x32xf32>
    %133 = vector.extract_strided_slice %124 {offsets = [0, 64], sizes = [2, 32], strides = [1, 1]} : vector<2x128xf32> to vector<2x32xf32>
    %134 = math.tanh %133 : vector<2x32xf32>
    %135 = arith.mulf %131, %119 : vector<2x32xf32>
    %136 = arith.mulf %130, %134 : vector<2x32xf32>
    %137 = arith.addf %135, %136 : vector<2x32xf32>
    %138 = math.tanh %137 : vector<2x32xf32>
    %139 = arith.mulf %132, %138 : vector<2x32xf32>
    %140 = vector.extract_strided_slice %85 {offsets = [6, 0], sizes = [2, 128], strides = [1, 1]} : vector<8x128xf32> to vector<2x128xf32>
    %cst_23 = arith.constant dense<0.000000e+00> : vector<2x128xf32>
    %141 = tpu.matmul %139, %3, %cst_23 {dimension_numbers = #tpu.dot_dimension_numbers<[1], [0], [0], [1], [0, 0, 1, 1], [], []>} : vector<2x32xf32>, vector<32x128xf32>, vector<2x128xf32> -> vector<2x128xf32>
    %142 = arith.addf %140, %141 : vector<2x128xf32>
    %143 = arith.negf %142 : vector<2x128xf32>
    %144 = math.exp %143 : vector<2x128xf32>
    %cst_24 = arith.constant 1.000000e+00 : f32
    %145 = vector.broadcast %cst_24 : f32 to vector<2x128xf32>
    %146 = arith.addf %145, %144 : vector<2x128xf32>
    %147 = arith.divf %145, %146 : vector<2x128xf32>
    %148 = vector.extract_strided_slice %147 {offsets = [0, 0], sizes = [2, 32], strides = [1, 1]} : vector<2x128xf32> to vector<2x32xf32>
    %149 = vector.extract_strided_slice %147 {offsets = [0, 32], sizes = [2, 32], strides = [1, 1]} : vector<2x128xf32> to vector<2x32xf32>
    %150 = vector.extract_strided_slice %147 {offsets = [0, 96], sizes = [2, 32], strides = [1, 1]} : vector<2x128xf32> to vector<2x32xf32>
    %151 = vector.extract_strided_slice %142 {offsets = [0, 64], sizes = [2, 32], strides = [1, 1]} : vector<2x128xf32> to vector<2x32xf32>
    %152 = math.tanh %151 : vector<2x32xf32>
    %153 = arith.mulf %149, %137 : vector<2x32xf32>
    %154 = arith.mulf %148, %152 : vector<2x32xf32>
    %155 = arith.addf %153, %154 : vector<2x32xf32>
    %156 = math.tanh %155 : vector<2x32xf32>
    %157 = arith.mulf %150, %156 : vector<2x32xf32>
    %c2_i32 = arith.constant 2 : i32
    %c0_25 = arith.constant 0 : index
    %c0_26 = arith.constant 0 : index
    %158 = vector.load %arg4[%c0_25, %c0_26] : memref<2x32xf32, #tpu.memory_space<vmem>>, vector<2x32xf32>
    tpu.vector_store %arg4[%c0_25, %c0_26], %157 {strides = array<i32>} : memref<2x32xf32, #tpu.memory_space<vmem>>, vector<2x32xf32>,
    %c0_27 = arith.constant 0 : index
    %c0_28 = arith.constant 0 : index
    %159 = vector.load %arg5[%c0_27, %c0_28] : memref<2x32xf32, #tpu.memory_space<vmem>>, vector<2x32xf32>
    tpu.vector_store %arg5[%c0_27, %c0_28], %155 {strides = array<i32>} : memref<2x32xf32, #tpu.memory_space<vmem>>, vector<2x32xf32>,
    %c0_i32_29 = arith.constant 0 : i32
    %160 = arith.cmpi eq, %arg0, %c0_i32_29 : i32
    %161 = arith.extui %160 : i1 to i32
    %c0_i32_30 = arith.constant 0 : i32
    %162 = arith.cmpi ne, %161, %c0_i32_30 : i32
    scf.if %162 {
      %c0_31 = arith.constant 0 : index
      %c0_32 = arith.constant 0 : index
      %163 = vector.load %arg3[%c0_31, %c0_32] : memref<2x32xf32, #tpu.memory_space<vmem>>, vector<2x32xf32>
      tpu.vector_store %arg3[%c0_31, %c0_32], %157 {strides = array<i32>} : memref<2x32xf32, #tpu.memory_space<vmem>>, vector<2x32xf32>,
    } else {
    }
    return
  }
  func.func @transform_0(%arg0: i32) -> (i32, i32) {
    %c0_i32 = arith.constant 0 : i32
    %c0_i32_0 = arith.constant 0 : i32
    return %arg0, %c0_i32 : i32, i32
  }
  func.func @transform_1(%arg0: i32) -> (i32, i32) {
    %c0_i32 = arith.constant 0 : i32
    %c0_i32_0 = arith.constant 0 : i32
    %c0_i32_1 = arith.constant 0 : i32
    return %c0_i32, %c0_i32_0 : i32, i32
  }
  func.func @transform_2(%arg0: i32) -> (i32, i32) {
    %c0_i32 = arith.constant 0 : i32
    %c0_i32_0 = arith.constant 0 : i32
    %c0_i32_1 = arith.constant 0 : i32
    return %c0_i32, %c0_i32_0 : i32, i32
  }
}

</mosaic_0001>

<llo_original>
// kernel: tpu_custom_call.1
$region0: #{tpu_custom_call.1}
  #allocation0 [shape = 'u32[]', space=smem, size = 0x4, offset = 0x4, fixed_abs, tag = 'smem constant byte address 0x4 - core index']
  #allocation1 [shape = 'u32[144,128]{1,0:T(1,128)}', space=vmem, size = 0x12000, scoped, tag = 'internal scratch']
  #allocation2 [shape = 'f32[2,32]{1,0:T(2,128)}', space=vmem, size = 0x400, scoped, tag = 'scratch operand']
  #allocation3 [shape = 'f32[2,32]{1,0:T(2,128)}', space=vmem, size = 0x400, scoped, tag = 'scratch operand']
  %s0 = inlined_call_operand.hbm [shape: f32[16,128], index: 0, kind: input, shape index: {}]
  %s1 = inlined_call_operand.hbm [shape: f32[32,128], index: 1, kind: input, shape index: {}]
  %s2 = inlined_call_operand.hbm [shape: f32[2,32], index: 2, kind: output, shape index: {}]
  %s3 = sld [smem:[#allocation0]]
  $region34: #{tpu_custom_call.1} parent=0
    _
  %s5 = ssub.s32 1, %s3
  %s6 = scalar_select 0, %s5, %s3
  $region1: #{tpu_custom_call.1} parent=0
    #allocation4 [shape = 'u8[8192]{0}', space=vmem, size = 0x2000, scoped, tag = 'input window, operand 0, single buffered']
    #allocation5 [shape = 's32[1]{0}', space=sflag, size = 0x4, scoped, tag = 'scoped memory for tpu_custom_call.1']
    #allocation6 [shape = 's32[1]{0}', space=sflag, size = 0x4, scoped, tag = 'scoped memory for tpu_custom_call.1']
    #allocation7 [shape = 'u8[16384]{0}', space=vmem, size = 0x4000, scoped, tag = 'input window, operand 1, single buffered']
    #allocation8 [shape = 's32[1]{0}', space=sflag, size = 0x4, scoped, tag = 'scoped memory for tpu_custom_call.1']
    #allocation9 [shape = 'u8[1024]{0}', space=vmem, size = 0x400, scoped, tag = 'output window, operand 0, single buffered']
    %7 = vsyncpa [#allocation5], 0
    %8 = vsyncpa [#allocation8], 0
    %9 = vsyncpa [#allocation6], 0
    // Predicated region
    $region2: #{tpu_custom_call.1} parent=1 // pred_check
      _
    $region3: #{tpu_custom_call.1} parent=1 // pred_check_branch
      %11 = sbr.rel (0) target = $region5
    $region4: #{tpu_custom_call.1} parent=1 // pred_region
      %s13 = ssub.s32 256, 256
      %14 = vsyncadd [#allocation5], %s13
      %s15 = sshll.u32 [#allocation4], 4
      %s16 = int_to_ptr.vmem [resolvable:$true] %s15
      %21 = dma.hbm_to_vmem [thread:$0]  %s0, 256, %s16, [#allocation5], 128, 128, 8
    $region5: #{tpu_custom_call.1} parent=1 // pred_fallthru
      _
    // Predicated region
    $region6: #{tpu_custom_call.1} parent=1 // pred_check
      _
    $region7: #{tpu_custom_call.1} parent=1 // pred_check_branch
      %23 = sbr.rel (0) target = $region9
    $region8: #{tpu_custom_call.1} parent=1 // pred_region
      %s25 = ssub.s32 512, 512
      %26 = vsyncadd [#allocation8], %s25
      %s27 = sshll.u32 [#allocation7], 4
      %s28 = int_to_ptr.vmem [resolvable:$true] %s27
      %33 = dma.hbm_to_vmem [thread:$0]  %s1, 512, %s28, [#allocation8], 128, 128, 8
    $region9: #{tpu_custom_call.1} parent=1 // pred_fallthru
      _
    // Predicated region
    $region10: #{tpu_custom_call.1} parent=1 // pred_check
      _
    $region11: #{tpu_custom_call.1} parent=1 // pred_check_branch
      %35 = sbr.rel (0) target = $region13
    $region12: #{tpu_custom_call.1} parent=1 // pred_region
      %36 = dma.done [#allocation5], 256
    $region13: #{tpu_custom_call.1} parent=1 // pred_fallthru
      _
    // Predicated region
    $region14: #{tpu_custom_call.1} parent=1 // pred_check
      _
    $region15: #{tpu_custom_call.1} parent=1 // pred_check_branch
      %38 = sbr.rel (0) target = $region17
    $region16: #{tpu_custom_call.1} parent=1 // pred_region
      %39 = dma.done [#allocation8], 512
    $region17: #{tpu_custom_call.1} parent=1 // pred_fallthru
      _
    %p40 = scmp.eq.s32.totalorder 0, 0
    // Predicated region
    $region18: #{tpu_custom_call.1} parent=1 // pred_check
      %p41 = pneg %p40
    $region19: #{tpu_custom_call.1} parent=1 // pred_check_branch
      %43 = sbr.rel (%p41) target = $region21
    $region20: #{tpu_custom_call.1} parent=1 // pred_region
      %vm44 = vcmask 254976
      %45 = vst.msk [vmem:[#allocation2] sm:$0x3] %vm44, 0.0
      %46 = vst.msk [vmem:[#allocation3] sm:$0x3] %vm44, 0.0
    $region21: #{tpu_custom_call.1} parent=1 // pred_fallthru
      _
    %v47 = vld [vmem:[#allocation7] sm:$0xff]
    %v48 = vld [vmem:[#allocation7 + $0x8] sm:$0xff]
    %v49 = vld [vmem:[#allocation7 + $0x10] sm:$0xff]
    %v50 = vld [vmem:[#allocation7 + $0x18] sm:$0xff]
    %v51 = vld [vmem:[#allocation2] sm:$0x3]
    %v52 = vld [vmem:[#allocation3] sm:$0x3]
    %v53 = vld [vmem:[#allocation4] sm:$0xff]
    %vm54 = vcmask 261120
    %v56 = vsel %vm54, %v51, 0
    %58 = vmatprep.subr.mxu0 0.0
    %59 = vmatpush1.msra.mxu0 0.0
    %60 = vmatprep.subr.mxu0 0.0
    %61 = vmatpush1.msra.mxu0 0.0
    %62 = vmatprep.subr.mxu0 0.0
    %63 = vmatpush1.msra.mxu0 0.0
    %64 = vmatprep.subr.mxu0 0.0
    %65 = vmatpush1.msra.mxu0 0.0
    %66 = vmatprep.subr.mxu0 0.0
    %67 = vmatpush1.msra.mxu0 0.0
    %68 = vmatprep.subr.mxu0 0.0
    %69 = vmatpush1.msra.mxu0 0.0
    %70 = vmatprep.subr.mxu0 0.0
    %71 = vmatpush1.msra.mxu0 0.0
    %72 = vmatprep.subr.mxu0 0.0
    %73 = vmatpush1.msra.mxu0 0.0
    %74 = vmatprep.subr.mxu0 0.0
    %75 = vmatpush1.msra.mxu0 0.0
    %76 = vmatprep.subr.mxu0 0.0
    %77 = vmatpush1.msra.mxu0 0.0
    %78 = vmatprep.subr.mxu0 0.0
    %79 = vmatpush1.msra.mxu0 0.0
    %80 = vmatprep.subr.mxu0 0.0
    %81 = vmatpush1.msra.mxu0 0.0
    %82 = vmatprep.subr.mxu0 0.0
    %83 = vmatpush1.msra.mxu0 %v50
    %84 = vmatprep.subr.mxu0 0.0
    %85 = vmatpush1.msra.mxu0 %v49
    %86 = vmatprep.subr.mxu0 0.0
    %87 = vmatpush1.msra.mxu0 %v48
    %88 = vmatprep.subr.mxu0 0.0
    %89 = vmatpush1.msra.mxu0 %v47
    %90 = vmatprep.subr.mxu0 0.0
    %91 = vmatpush2.msra.mxu0 0.0
    %92 = vmatprep.subr.mxu0 0.0
    %93 = vmatpush2.msra.mxu0 0.0
    %94 = vmatprep.subr.mxu0 0.0
    %95 = vmatpush2.msra.mxu0 0.0
    %96 = vmatprep.subr.mxu0 0.0
    %97 = vmatpush2.msra.mxu0 0.0
    %98 = vmatprep.subr.mxu0 0.0
    %99 = vmatpush2.msra.mxu0 0.0
    %100 = vmatprep.subr.mxu0 0.0
    %101 = vmatpush2.msra.mxu0 0.0
    %102 = vmatprep.subr.mxu0 0.0
    %103 = vmatpush2.msra.mxu0 0.0
    %104 = vmatprep.subr.mxu0 0.0
    %105 = vmatpush2.msra.mxu0 0.0
    %106 = vmatprep.subr.mxu0 0.0
    %107 = vmatpush2.msra.mxu0 0.0
    %108 = vmatprep.subr.mxu0 0.0
    %109 = vmatpush2.msra.mxu0 0.0
    %110 = vmatprep.subr.mxu0 0.0
    %111 = vmatpush2.msra.mxu0 0.0
    %112 = vmatprep.subr.mxu0 0.0
    %113 = vmatpush2.msra.mxu0 0.0
    %114 = vmatprep.subr.mxu0 0.0
    %115 = vmatpush2.msra.mxu0 0.0
    %116 = vmatprep.subr.mxu0 0.0
    %117 = vmatpush2.msra.mxu0 0.0
    %118 = vmatprep.subr.mxu0 0.0
    %119 = vmatpush2.msra.mxu0 0.0
    %120 = vmatprep.subr.mxu0 0.0
    %121 = vmatpush2.msra.mxu0 0.0
    %122 = vmatprep.mubr.f32.mxu0 0.0
    %123 = vmatmul.mubr.f32.gmra.mxu0 %v56
    %v124 = vpop.f32.mrf.mxu0
    %v125 = vadd.f32 0.0, %v124
    %v126 = vpop.f32.mrf.mxu0
    %127 = vdwg.mxu0
    %v128 = vadd.f32 %v53, %v125
    %v129 = vxor.u32 %v128, 2147483648
    %v130 = vmul.f32 %v129, 1.442695
    %v131 = vpow.pop %v130
    %v132 = vadd.f32 %v131, 1.0
    %v133 = vrcp.pop %v132
    %v134 = vmul.f32 1.0, %v133
    %v135 = vtanh.pop %v128
    %137 = vrot.lane.b32.xlu0 %v52, 32
    %v138 = vpop.permute.xlu0 %137
    %v140 = vmul.f32 %v134, %v138
    %142 = vrot.lane.b32.xlu0 %v135, 64
    %v143 = vpop.permute.xlu0 %142
    %v145 = vmul.f32 %v134, %v143
    %147 = vrot.lane.b32.xlu0 %v145, 32
    %v148 = vpop.permute.xlu0 %147
    %v150 = vadd.f32 %v140, %v148
    %v151 = vtanh.pop %v150
    %153 = vrot.lane.b32.xlu0 %v151, 64
    %v154 = vpop.permute.xlu0 %153
    %v156 = vmul.f32 %v134, %v154
    %158 = vrot.lane.b32.xlu0 %v156, 32
    %v159 = vpop.permute.xlu0 %158
    %v160 = vsel %vm54, %v159, 0
    %162 = vmatprep.subr.mxu0 0.0
    %163 = vmatpush1.msra.mxu0 0.0
    %164 = vmatprep.subr.mxu0 0.0
    %165 = vmatpush1.msra.mxu0 0.0
    %166 = vmatprep.subr.mxu0 0.0
    %167 = vmatpush1.msra.mxu0 0.0
    %168 = vmatprep.subr.mxu0 0.0
    %169 = vmatpush1.msra.mxu0 0.0
    %170 = vmatprep.subr.mxu0 0.0
    %171 = vmatpush1.msra.mxu0 0.0
    %172 = vmatprep.subr.mxu0 0.0
    %173 = vmatpush1.msra.mxu0 0.0
    %174 = vmatprep.subr.mxu0 0.0
    %175 = vmatpush1.msra.mxu0 0.0
    %176 = vmatprep.subr.mxu0 0.0
    %177 = vmatpush1.msra.mxu0 0.0
    %178 = vmatprep.subr.mxu0 0.0
    %179 = vmatpush1.msra.mxu0 0.0
    %180 = vmatprep.subr.mxu0 0.0
    %181 = vmatpush1.msra.mxu0 0.0
    %182 = vmatprep.subr.mxu0 0.0
    %183 = vmatpush1.msra.mxu0 0.0
    %184 = vmatprep.subr.mxu0 0.0
    %185 = vmatpush1.msra.mxu0 0.0
    %186 = vmatprep.subr.mxu0 0.0
    %187 = vmatpush1.msra.mxu0 %v50
    %188 = vmatprep.subr.mxu0 0.0
    %189 = vmatpush1.msra.mxu0 %v49
    %190 = vmatprep.subr.mxu0 0.0
    %191 = vmatpush1.msra.mxu0 %v48
    %192 = vmatprep.subr.mxu0 0.0
    %193 = vmatpush1.msra.mxu0 %v47
    %194 = vmatprep.subr.mxu0 0.0
    %195 = vmatpush2.msra.mxu0 0.0
    %196 = vmatprep.subr.mxu0 0.0
    %197 = vmatpush2.msra.mxu0 0.0
    %198 = vmatprep.subr.mxu0 0.0
    %199 = vmatpush2.msra.mxu0 0.0
    %200 = vmatprep.subr.mxu0 0.0
    %201 = vmatpush2.msra.mxu0 0.0
    %202 = vmatprep.subr.mxu0 0.0
    %203 = vmatpush2.msra.mxu0 0.0
    %204 = vmatprep.subr.mxu0 0.0
    %205 = vmatpush2.msra.mxu0 0.0
    %206 = vmatprep.subr.mxu0 0.0
    %207 = vmatpush2.msra.mxu0 0.0
    %208 = vmatprep.subr.mxu0 0.0
    %209 = vmatpush2.msra.mxu0 0.0
    %210 = vmatprep.subr.mxu0 0.0
    %211 = vmatpush2.msra.mxu0 0.0
    %212 = vmatprep.subr.mxu0 0.0
    %213 = vmatpush2.msra.mxu0 0.0
    %214 = vmatprep.subr.mxu0 0.0
    %215 = vmatpush2.msra.mxu0 0.0
    %216 = vmatprep.subr.mxu0 0.0
    %217 = vmatpush2.msra.mxu0 0.0
    %218 = vmatprep.subr.mxu0 0.0
    %219 = vmatpush2.msra.mxu0 0.0
    %220 = vmatprep.subr.mxu0 0.0
    %221 = vmatpush2.msra.mxu0 0.0
    %222 = vmatprep.subr.mxu0 0.0
    %223 = vmatpush2.msra.mxu0 0.0
    %224 = vmatprep.subr.mxu0 0.0
    %225 = vmatpush2.msra.mxu0 0.0
    %226 = vmatprep.mubr.f32.mxu0 0.0
    %227 = vmatmul.mubr.f32.gmra.mxu0 %v160
    %v228 = vpop.f32.mrf.mxu0
    %v229 = vadd.f32 0.0, %v228
    %v230 = vpop.f32.mrf.mxu0
    %231 = vdwg.mxu0
    %v233 = vrot.slane %v229, 6
    %v235 = vadd.f32 %v53, %v233
    %v236 = vxor.u32 %v235, 2147483648
    %v237 = vmul.f32 %v236, 1.442695
    %v238 = vpow.pop %v237
    %v239 = vadd.f32 %v238, 1.0
    %v240 = vrcp.pop %v239
    %v241 = vmul.f32 1.0, %v240
    %v242 = vtanh.pop %v235
    %v244 = vrot.slane %v150, 6
    %v246 = vmul.f32 %v241, %v244
    %248 = vrot.lane.b32.xlu0 %v242, 64
    %v249 = vpop.permute.xlu0 %248
    %v251 = vmul.f32 %v241, %v249
    %253 = vrot.lane.b32.xlu0 %v251, 32
    %v254 = vpop.permute.xlu0 %253
    %v256 = vadd.f32 %v246, %v254
    %v257 = vtanh.pop %v256
    %259 = vrot.lane.b32.xlu0 %v257, 64
    %v260 = vpop.permute.xlu0 %259
    %v262 = vmul.f32 %v241, %v260
    %v264 = vrot.slane %v262, 2
    %265 = vrot.lane.b32.xlu0 %v264, 32
    %v266 = vpop.permute.xlu0 %265
    %v267 = vsel %vm54, %v266, 0
    %269 = vmatprep.subr.mxu0 0.0
    %270 = vmatpush1.msra.mxu0 0.0
    %271 = vmatprep.subr.mxu0 0.0
    %272 = vmatpush1.msra.mxu0 0.0
    %273 = vmatprep.subr.mxu0 0.0
    %274 = vmatpush1.msra.mxu0 0.0
    %275 = vmatprep.subr.mxu0 0.0
    %276 = vmatpush1.msra.mxu0 0.0
    %277 = vmatprep.subr.mxu0 0.0
    %278 = vmatpush1.msra.mxu0 0.0
    %279 = vmatprep.subr.mxu0 0.0
    %280 = vmatpush1.msra.mxu0 0.0
    %281 = vmatprep.subr.mxu0 0.0
    %282 = vmatpush1.msra.mxu0 0.0
    %283 = vmatprep.subr.mxu0 0.0
    %284 = vmatpush1.msra.mxu0 0.0
    %285 = vmatprep.subr.mxu0 0.0
    %286 = vmatpush1.msra.mxu0 0.0
    %287 = vmatprep.subr.mxu0 0.0
    %288 = vmatpush1.msra.mxu0 0.0
    %289 = vmatprep.subr.mxu0 0.0
    %290 = vmatpush1.msra.mxu0 0.0
    %291 = vmatprep.subr.mxu0 0.0
    %292 = vmatpush1.msra.mxu0 0.0
    %293 = vmatprep.subr.mxu0 0.0
    %294 = vmatpush1.msra.mxu0 %v50
    %295 = vmatprep.subr.mxu0 0.0
    %296 = vmatpush1.msra.mxu0 %v49
    %297 = vmatprep.subr.mxu0 0.0
    %298 = vmatpush1.msra.mxu0 %v48
    %299 = vmatprep.subr.mxu0 0.0
    %300 = vmatpush1.msra.mxu0 %v47
    %301 = vmatprep.subr.mxu0 0.0
    %302 = vmatpush2.msra.mxu0 0.0
    %303 = vmatprep.subr.mxu0 0.0
    %304 = vmatpush2.msra.mxu0 0.0
    %305 = vmatprep.subr.mxu0 0.0
    %306 = vmatpush2.msra.mxu0 0.0
    %307 = vmatprep.subr.mxu0 0.0
    %308 = vmatpush2.msra.mxu0 0.0
    %309 = vmatprep.subr.mxu0 0.0
    %310 = vmatpush2.msra.mxu0 0.0
    %311 = vmatprep.subr.mxu0 0.0
    %312 = vmatpush2.msra.mxu0 0.0
    %313 = vmatprep.subr.mxu0 0.0
    %314 = vmatpush2.msra.mxu0 0.0
    %315 = vmatprep.subr.mxu0 0.0
    %316 = vmatpush2.msra.mxu0 0.0
    %317 = vmatprep.subr.mxu0 0.0
    %318 = vmatpush2.msra.mxu0 0.0
    %319 = vmatprep.subr.mxu0 0.0
    %320 = vmatpush2.msra.mxu0 0.0
    %321 = vmatprep.subr.mxu0 0.0
    %322 = vmatpush2.msra.mxu0 0.0
    %323 = vmatprep.subr.mxu0 0.0
    %324 = vmatpush2.msra.mxu0 0.0
    %325 = vmatprep.subr.mxu0 0.0
    %326 = vmatpush2.msra.mxu0 0.0
    %327 = vmatprep.subr.mxu0 0.0
    %328 = vmatpush2.msra.mxu0 0.0
    %329 = vmatprep.subr.mxu0 0.0
    %330 = vmatpush2.msra.mxu0 0.0
    %331 = vmatprep.subr.mxu0 0.0
    %332 = vmatpush2.msra.mxu0 0.0
    %333 = vmatprep.mubr.f32.mxu0 0.0
    %334 = vmatmul.mubr.f32.gmra.mxu0 %v267
    %v335 = vpop.f32.mrf.mxu0
    %v336 = vadd.f32 0.0, %v335
    %v337 = vpop.f32.mrf.mxu0
    %338 = vdwg.mxu0
    %v340 = vrot.slane %v336, 4
    %v342 = vadd.f32 %v53, %v340
    %v343 = vxor.u32 %v342, 2147483648
    %v344 = vmul.f32 %v343, 1.442695
    %v345 = vpow.pop %v344
    %v346 = vadd.f32 %v345, 1.0
    %v347 = vrcp.pop %v346
    %v348 = vmul.f32 1.0, %v347
    %v349 = vtanh.pop %v342
    %v351 = vrot.slane %v256, 6
    %v353 = vmul.f32 %v348, %v351
    %355 = vrot.lane.b32.xlu0 %v349, 64
    %v356 = vpop.permute.xlu0 %355
    %v358 = vmul.f32 %v348, %v356
    %360 = vrot.lane.b32.xlu0 %v358, 32
    %v361 = vpop.permute.xlu0 %360
    %v363 = vadd.f32 %v353, %v361
    %v364 = vtanh.pop %v363
    %366 = vrot.lane.b32.xlu0 %v364, 64
    %v367 = vpop.permute.xlu0 %366
    %v369 = vmul.f32 %v348, %v367
    %v371 = vrot.slane %v369, 4
    %372 = vrot.lane.b32.xlu0 %v371, 32
    %v373 = vpop.permute.xlu0 %372
    %v374 = vsel %vm54, %v373, 0
    %376 = vmatprep.subr.mxu0 0.0
    %377 = vmatpush1.msra.mxu0 0.0
    %378 = vmatprep.subr.mxu0 0.0
    %379 = vmatpush1.msra.mxu0 0.0
    %380 = vmatprep.subr.mxu0 0.0
    %381 = vmatpush1.msra.mxu0 0.0
    %382 = vmatprep.subr.mxu0 0.0
    %383 = vmatpush1.msra.mxu0 0.0
    %384 = vmatprep.subr.mxu0 0.0
    %385 = vmatpush1.msra.mxu0 0.0
    %386 = vmatprep.subr.mxu0 0.0
    %387 = vmatpush1.msra.mxu0 0.0
    %388 = vmatprep.subr.mxu0 0.0
    %389 = vmatpush1.msra.mxu0 0.0
    %390 = vmatprep.subr.mxu0 0.0
    %391 = vmatpush1.msra.mxu0 0.0
    %392 = vmatprep.subr.mxu0 0.0
    %393 = vmatpush1.msra.mxu0 0.0
    %394 = vmatprep.subr.mxu0 0.0
    %395 = vmatpush1.msra.mxu0 0.0
    %396 = vmatprep.subr.mxu0 0.0
    %397 = vmatpush1.msra.mxu0 0.0
    %398 = vmatprep.subr.mxu0 0.0
    %399 = vmatpush1.msra.mxu0 0.0
    %400 = vmatprep.subr.mxu0 0.0
    %401 = vmatpush1.msra.mxu0 %v50
    %402 = vmatprep.subr.mxu0 0.0
    %403 = vmatpush1.msra.mxu0 %v49
    %404 = vmatprep.subr.mxu0 0.0
    %405 = vmatpush1.msra.mxu0 %v48
    %406 = vmatprep.subr.mxu0 0.0
    %407 = vmatpush1.msra.mxu0 %v47
    %408 = vmatprep.subr.mxu0 0.0
    %409 = vmatpush2.msra.mxu0 0.0
    %410 = vmatprep.subr.mxu0 0.0
    %411 = vmatpush2.msra.mxu0 0.0
    %412 = vmatprep.subr.mxu0 0.0
    %413 = vmatpush2.msra.mxu0 0.0
    %414 = vmatprep.subr.mxu0 0.0
    %415 = vmatpush2.msra.mxu0 0.0
    %416 = vmatprep.subr.mxu0 0.0
    %417 = vmatpush2.msra.mxu0 0.0
    %418 = vmatprep.subr.mxu0 0.0
    %419 = vmatpush2.msra.mxu0 0.0
    %420 = vmatprep.subr.mxu0 0.0
    %421 = vmatpush2.msra.mxu0 0.0
    %422 = vmatprep.subr.mxu0 0.0
    %423 = vmatpush2.msra.mxu0 0.0
    %424 = vmatprep.subr.mxu0 0.0
    %425 = vmatpush2.msra.mxu0 0.0
    %426 = vmatprep.subr.mxu0 0.0
    %427 = vmatpush2.msra.mxu0 0.0
    %428 = vmatprep.subr.mxu0 0.0
    %429 = vmatpush2.msra.mxu0 0.0
    %430 = vmatprep.subr.mxu0 0.0
    %431 = vmatpush2.msra.mxu0 0.0
    %432 = vmatprep.subr.mxu0 0.0
    %433 = vmatpush2.msra.mxu0 0.0
    %434 = vmatprep.subr.mxu0 0.0
    %435 = vmatpush2.msra.mxu0 0.0
    %436 = vmatprep.subr.mxu0 0.0
    %437 = vmatpush2.msra.mxu0 0.0
    %438 = vmatprep.subr.mxu0 0.0
    %439 = vmatpush2.msra.mxu0 0.0
    %440 = vmatprep.mubr.f32.mxu0 0.0
    %441 = vmatmul.mubr.f32.gmra.mxu0 %v374
    %v442 = vpop.f32.mrf.mxu0
    %v443 = vadd.f32 0.0, %v442
    %v444 = vpop.f32.mrf.mxu0
    %445 = vdwg.mxu0
    %v447 = vrot.slane %v443, 2
    %v449 = vadd.f32 %v53, %v447
    %v450 = vxor.u32 %v449, 2147483648
    %v451 = vmul.f32 %v450, 1.442695
    %v452 = vpow.pop %v451
    %v453 = vadd.f32 %v452, 1.0
    %v454 = vrcp.pop %v453
    %v455 = vmul.f32 1.0, %v454
    %v456 = vtanh.pop %v449
    %v458 = vrot.slane %v363, 6
    %v460 = vmul.f32 %v455, %v458
    %462 = vrot.lane.b32.xlu0 %v456, 64
    %v463 = vpop.permute.xlu0 %462
    %v465 = vmul.f32 %v455, %v463
    %467 = vrot.lane.b32.xlu0 %v465, 32
    %v468 = vpop.permute.xlu0 %467
    %v470 = vadd.f32 %v460, %v468
    %v471 = vtanh.pop %v470
    %473 = vrot.lane.b32.xlu0 %v471, 64
    %v474 = vpop.permute.xlu0 %473
    %v476 = vmul.f32 %v455, %v474
    %s477 = scalar_lea.vmem [#allocation4], 8
    %v478 = vld [vmem:[%s477] sm:$0xff]
    %v480 = vrot.slane %v476, 6
    %481 = vrot.lane.b32.xlu0 %v480, 32
    %v482 = vpop.permute.xlu0 %481
    %v483 = vsel %vm54, %v482, 0
    %485 = vmatprep.subr.mxu0 0.0
    %486 = vmatpush1.msra.mxu0 0.0
    %487 = vmatprep.subr.mxu0 0.0
    %488 = vmatpush1.msra.mxu0 0.0
    %489 = vmatprep.subr.mxu0 0.0
    %490 = vmatpush1.msra.mxu0 0.0
    %491 = vmatprep.subr.mxu0 0.0
    %492 = vmatpush1.msra.mxu0 0.0
    %493 = vmatprep.subr.mxu0 0.0
    %494 = vmatpush1.msra.mxu0 0.0
    %495 = vmatprep.subr.mxu0 0.0
    %496 = vmatpush1.msra.mxu0 0.0
    %497 = vmatprep.subr.mxu0 0.0
    %498 = vmatpush1.msra.mxu0 0.0
    %499 = vmatprep.subr.mxu0 0.0
    %500 = vmatpush1.msra.mxu0 0.0
    %501 = vmatprep.subr.mxu0 0.0
    %502 = vmatpush1.msra.mxu0 0.0
    %503 = vmatprep.subr.mxu0 0.0
    %504 = vmatpush1.msra.mxu0 0.0
    %505 = vmatprep.subr.mxu0 0.0
    %506 = vmatpush1.msra.mxu0 0.0
    %507 = vmatprep.subr.mxu0 0.0
    %508 = vmatpush1.msra.mxu0 0.0
    %509 = vmatprep.subr.mxu0 0.0
    %510 = vmatpush1.msra.mxu0 %v50
    %511 = vmatprep.subr.mxu0 0.0
    %512 = vmatpush1.msra.mxu0 %v49
    %513 = vmatprep.subr.mxu0 0.0
    %514 = vmatpush1.msra.mxu0 %v48
    %515 = vmatprep.subr.mxu0 0.0
    %516 = vmatpush1.msra.mxu0 %v47
    %517 = vmatprep.subr.mxu0 0.0
    %518 = vmatpush2.msra.mxu0 0.0
    %519 = vmatprep.subr.mxu0 0.0
    %520 = vmatpush2.msra.mxu0 0.0
    %521 = vmatprep.subr.mxu0 0.0
    %522 = vmatpush2.msra.mxu0 0.0
    %523 = vmatprep.subr.mxu0 0.0
    %524 = vmatpush2.msra.mxu0 0.0
    %525 = vmatprep.subr.mxu0 0.0
    %526 = vmatpush2.msra.mxu0 0.0
    %527 = vmatprep.subr.mxu0 0.0
    %528 = vmatpush2.msra.mxu0 0.0
    %529 = vmatprep.subr.mxu0 0.0
    %530 = vmatpush2.msra.mxu0 0.0
    %531 = vmatprep.subr.mxu0 0.0
    %532 = vmatpush2.msra.mxu0 0.0
    %533 = vmatprep.subr.mxu0 0.0
    %534 = vmatpush2.msra.mxu0 0.0
    %535 = vmatprep.subr.mxu0 0.0
    %536 = vmatpush2.msra.mxu0 0.0
    %537 = vmatprep.subr.mxu0 0.0
    %538 = vmatpush2.msra.mxu0 0.0
    %539 = vmatprep.subr.mxu0 0.0
    %540 = vmatpush2.msra.mxu0 0.0
    %541 = vmatprep.subr.mxu0 0.0
    %542 = vmatpush2.msra.mxu0 0.0
    %543 = vmatprep.subr.mxu0 0.0
    %544 = vmatpush2.msra.mxu0 0.0
    %545 = vmatprep.subr.mxu0 0.0
    %546 = vmatpush2.msra.mxu0 0.0
    %547 = vmatprep.subr.mxu0 0.0
    %548 = vmatpush2.msra.mxu0 0.0
    %549 = vmatprep.mubr.f32.mxu0 0.0
    %550 = vmatmul.mubr.f32.gmra.mxu0 %v483
    %v551 = vpop.f32.mrf.mxu0
    %v552 = vadd.f32 0.0, %v551
    %v553 = vpop.f32.mrf.mxu0
    %554 = vdwg.mxu0
    %v555 = vadd.f32 %v478, %v552
    %v556 = vxor.u32 %v555, 2147483648
    %v557 = vmul.f32 %v556, 1.442695
    %v558 = vpow.pop %v557
    %v559 = vadd.f32 %v558, 1.0
    %v560 = vrcp.pop %v559
    %v561 = vmul.f32 1.0, %v560
    %v562 = vtanh.pop %v555
    %v564 = vrot.slane %v470, 6
    %v566 = vmul.f32 %v561, %v564
    %568 = vrot.lane.b32.xlu0 %v562, 64
    %v569 = vpop.permute.xlu0 %568
    %v571 = vmul.f32 %v561, %v569
    %573 = vrot.lane.b32.xlu0 %v571, 32
    %v574 = vpop.permute.xlu0 %573
    %v576 = vadd.f32 %v566, %v574
    %v577 = vtanh.pop %v576
    %579 = vrot.lane.b32.xlu0 %v577, 64
    %v580 = vpop.permute.xlu0 %579
    %v582 = vmul.f32 %v561, %v580
    %584 = vrot.lane.b32.xlu0 %v582, 32
    %v585 = vpop.permute.xlu0 %584
    %v586 = vsel %vm54, %v585, 0
    %588 = vmatprep.subr.mxu0 0.0
    %589 = vmatpush1.msra.mxu0 0.0
    %590 = vmatprep.subr.mxu0 0.0
    %591 = vmatpush1.msra.mxu0 0.0
    %592 = vmatprep.subr.mxu0 0.0
    %593 = vmatpush1.msra.mxu0 0.0
    %594 = vmatprep.subr.mxu0 0.0
    %595 = vmatpush1.msra.mxu0 0.0
    %596 = vmatprep.subr.mxu0 0.0
    %597 = vmatpush1.msra.mxu0 0.0
    %598 = vmatprep.subr.mxu0 0.0
    %599 = vmatpush1.msra.mxu0 0.0
    %600 = vmatprep.subr.mxu0 0.0
    %601 = vmatpush1.msra.mxu0 0.0
    %602 = vmatprep.subr.mxu0 0.0
    %603 = vmatpush1.msra.mxu0 0.0
    %604 = vmatprep.subr.mxu0 0.0
    %605 = vmatpush1.msra.mxu0 0.0
    %606 = vmatprep.subr.mxu0 0.0
    %607 = vmatpush1.msra.mxu0 0.0
    %608 = vmatprep.subr.mxu0 0.0
    %609 = vmatpush1.msra.mxu0 0.0
    %610 = vmatprep.subr.mxu0 0.0
    %611 = vmatpush1.msra.mxu0 0.0
    %612 = vmatprep.subr.mxu0 0.0
    %613 = vmatpush1.msra.mxu0 %v50
    %614 = vmatprep.subr.mxu0 0.0
    %615 = vmatpush1.msra.mxu0 %v49
    %616 = vmatprep.subr.mxu0 0.0
    %617 = vmatpush1.msra.mxu0 %v48
    %618 = vmatprep.subr.mxu0 0.0
    %619 = vmatpush1.msra.mxu0 %v47
    %620 = vmatprep.subr.mxu0 0.0
    %621 = vmatpush2.msra.mxu0 0.0
    %622 = vmatprep.subr.mxu0 0.0
    %623 = vmatpush2.msra.mxu0 0.0
    %624 = vmatprep.subr.mxu0 0.0
    %625 = vmatpush2.msra.mxu0 0.0
    %626 = vmatprep.subr.mxu0 0.0
    %627 = vmatpush2.msra.mxu0 0.0
    %628 = vmatprep.subr.mxu0 0.0
    %629 = vmatpush2.msra.mxu0 0.0
    %630 = vmatprep.subr.mxu0 0.0
    %631 = vmatpush2.msra.mxu0 0.0
    %632 = vmatprep.subr.mxu0 0.0
    %633 = vmatpush2.msra.mxu0 0.0
    %634 = vmatprep.subr.mxu0 0.0
    %635 = vmatpush2.msra.mxu0 0.0
    %636 = vmatprep.subr.mxu0 0.0
    %637 = vmatpush2.msra.mxu0 0.0
    %638 = vmatprep.subr.mxu0 0.0
    %639 = vmatpush2.msra.mxu0 0.0
    %640 = vmatprep.subr.mxu0 0.0
    %641 = vmatpush2.msra.mxu0 0.0
    %642 = vmatprep.subr.mxu0 0.0
    %643 = vmatpush2.msra.mxu0 0.0
    %644 = vmatprep.subr.mxu0 0.0
    %645 = vmatpush2.msra.mxu0 0.0
    %646 = vmatprep.subr.mxu0 0.0
    %647 = vmatpush2.msra.mxu0 0.0
    %648 = vmatprep.subr.mxu0 0.0
    %649 = vmatpush2.msra.mxu0 0.0
    %650 = vmatprep.subr.mxu0 0.0
    %651 = vmatpush2.msra.mxu0 0.0
    %652 = vmatprep.mubr.f32.mxu0 0.0
    %653 = vmatmul.mubr.f32.gmra.mxu0 %v586
    %v654 = vpop.f32.mrf.mxu0
    %v655 = vadd.f32 0.0, %v654
    %v656 = vpop.f32.mrf.mxu0
    %657 = vdwg.mxu0
    %v659 = vrot.slane %v655, 6
    %v661 = vadd.f32 %v478, %v659
    %v662 = vxor.u32 %v661, 2147483648
    %v663 = vmul.f32 %v662, 1.442695
    %v664 = vpow.pop %v663
    %v665 = vadd.f32 %v664, 1.0
    %v666 = vrcp.pop %v665
    %v667 = vmul.f32 1.0, %v666
    %v668 = vtanh.pop %v661
    %v670 = vrot.slane %v576, 6
    %v672 = vmul.f32 %v667, %v670
    %674 = vrot.lane.b32.xlu0 %v668, 64
    %v675 = vpop.permute.xlu0 %674
    %v677 = vmul.f32 %v667, %v675
    %679 = vrot.lane.b32.xlu0 %v677, 32
    %v680 = vpop.permute.xlu0 %679
    %v682 = vadd.f32 %v672, %v680
    %v683 = vtanh.pop %v682
    %685 = vrot.lane.b32.xlu0 %v683, 64
    %v686 = vpop.permute.xlu0 %685
    %v688 = vmul.f32 %v667, %v686
    %v690 = vrot.slane %v688, 2
    %691 = vrot.lane.b32.xlu0 %v690, 32
    %v692 = vpop.permute.xlu0 %691
    %v693 = vsel %vm54, %v692, 0
    %695 = vmatprep.subr.mxu0 0.0
    %696 = vmatpush1.msra.mxu0 0.0
    %697 = vmatprep.subr.mxu0 0.0
    %698 = vmatpush1.msra.mxu0 0.0
    %699 = vmatprep.subr.mxu0 0.0
    %700 = vmatpush1.msra.mxu0 0.0
    %701 = vmatprep.subr.mxu0 0.0
    %702 = vmatpush1.msra.mxu0 0.0
    %703 = vmatprep.subr.mxu0 0.0
    %704 = vmatpush1.msra.mxu0 0.0
    %705 = vmatprep.subr.mxu0 0.0
    %706 = vmatpush1.msra.mxu0 0.0
    %707 = vmatprep.subr.mxu0 0.0
    %708 = vmatpush1.msra.mxu0 0.0
    %709 = vmatprep.subr.mxu0 0.0
    %710 = vmatpush1.msra.mxu0 0.0
    %711 = vmatprep.subr.mxu0 0.0
    %712 = vmatpush1.msra.mxu0 0.0
    %713 = vmatprep.subr.mxu0 0.0
    %714 = vmatpush1.msra.mxu0 0.0
    %715 = vmatprep.subr.mxu0 0.0
    %716 = vmatpush1.msra.mxu0 0.0
    %717 = vmatprep.subr.mxu0 0.0
    %718 = vmatpush1.msra.mxu0 0.0
    %719 = vmatprep.subr.mxu0 0.0
    %720 = vmatpush1.msra.mxu0 %v50
    %721 = vmatprep.subr.mxu0 0.0
    %722 = vmatpush1.msra.mxu0 %v49
    %723 = vmatprep.subr.mxu0 0.0
    %724 = vmatpush1.msra.mxu0 %v48
    %725 = vmatprep.subr.mxu0 0.0
    %726 = vmatpush1.msra.mxu0 %v47
    %727 = vmatprep.subr.mxu0 0.0
    %728 = vmatpush2.msra.mxu0 0.0
    %729 = vmatprep.subr.mxu0 0.0
    %730 = vmatpush2.msra.mxu0 0.0
    %731 = vmatprep.subr.mxu0 0.0
    %732 = vmatpush2.msra.mxu0 0.0
    %733 = vmatprep.subr.mxu0 0.0
    %734 = vmatpush2.msra.mxu0 0.0
    %735 = vmatprep.subr.mxu0 0.0
    %736 = vmatpush2.msra.mxu0 0.0
    %737 = vmatprep.subr.mxu0 0.0
    %738 = vmatpush2.msra.mxu0 0.0
    %739 = vmatprep.subr.mxu0 0.0
    %740 = vmatpush2.msra.mxu0 0.0
    %741 = vmatprep.subr.mxu0 0.0
    %742 = vmatpush2.msra.mxu0 0.0
    %743 = vmatprep.subr.mxu0 0.0
    %744 = vmatpush2.msra.mxu0 0.0
    %745 = vmatprep.subr.mxu0 0.0
    %746 = vmatpush2.msra.mxu0 0.0
    %747 = vmatprep.subr.mxu0 0.0
    %748 = vmatpush2.msra.mxu0 0.0
    %749 = vmatprep.subr.mxu0 0.0
    %750 = vmatpush2.msra.mxu0 0.0
    %751 = vmatprep.subr.mxu0 0.0
    %752 = vmatpush2.msra.mxu0 0.0
    %753 = vmatprep.subr.mxu0 0.0
    %754 = vmatpush2.msra.mxu0 0.0
    %755 = vmatprep.subr.mxu0 0.0
    %756 = vmatpush2.msra.mxu0 0.0
    %757 = vmatprep.subr.mxu0 0.0
    %758 = vmatpush2.msra.mxu0 0.0
    %759 = vmatprep.mubr.f32.mxu0 0.0
    %760 = vmatmul.mubr.f32.gmra.mxu0 %v693
    %v761 = vpop.f32.mrf.mxu0
    %v762 = vadd.f32 0.0, %v761
    %v763 = vpop.f32.mrf.mxu0
    %764 = vdwg.mxu0
    %v766 = vrot.slane %v762, 4
    %v768 = vadd.f32 %v478, %v766
    %v769 = vxor.u32 %v768, 2147483648
    %v770 = vmul.f32 %v769, 1.442695
    %v771 = vpow.pop %v770
    %v772 = vadd.f32 %v771, 1.0
    %v773 = vrcp.pop %v772
    %v774 = vmul.f32 1.0, %v773
    %v775 = vtanh.pop %v768
    %v777 = vrot.slane %v682, 6
    %v779 = vmul.f32 %v774, %v777
    %781 = vrot.lane.b32.xlu0 %v775, 64
    %v782 = vpop.permute.xlu0 %781
    %v784 = vmul.f32 %v774, %v782
    %786 = vrot.lane.b32.xlu0 %v784, 32
    %v787 = vpop.permute.xlu0 %786
    %v789 = vadd.f32 %v779, %v787
    %v790 = vtanh.pop %v789
    %792 = vrot.lane.b32.xlu0 %v790, 64
    %v793 = vpop.permute.xlu0 %792
    %v795 = vmul.f32 %v774, %v793
    %v797 = vrot.slane %v795, 4
    %798 = vrot.lane.b32.xlu0 %v797, 32
    %v799 = vpop.permute.xlu0 %798
    %v800 = vsel %vm54, %v799, 0
    %802 = vmatprep.subr.mxu0 0.0
    %803 = vmatpush1.msra.mxu0 0.0
    %804 = vmatprep.subr.mxu0 0.0
    %805 = vmatpush1.msra.mxu0 0.0
    %806 = vmatprep.subr.mxu0 0.0
    %807 = vmatpush1.msra.mxu0 0.0
    %808 = vmatprep.subr.mxu0 0.0
    %809 = vmatpush1.msra.mxu0 0.0
    %810 = vmatprep.subr.mxu0 0.0
    %811 = vmatpush1.msra.mxu0 0.0
    %812 = vmatprep.subr.mxu0 0.0
    %813 = vmatpush1.msra.mxu0 0.0
    %814 = vmatprep.subr.mxu0 0.0
    %815 = vmatpush1.msra.mxu0 0.0
    %816 = vmatprep.subr.mxu0 0.0
    %817 = vmatpush1.msra.mxu0 0.0
    %818 = vmatprep.subr.mxu0 0.0
    %819 = vmatpush1.msra.mxu0 0.0
    %820 = vmatprep.subr.mxu0 0.0
    %821 = vmatpush1.msra.mxu0 0.0
    %822 = vmatprep.subr.mxu0 0.0
    %823 = vmatpush1.msra.mxu0 0.0
    %824 = vmatprep.subr.mxu0 0.0
    %825 = vmatpush1.msra.mxu0 0.0
    %826 = vmatprep.subr.mxu0 0.0
    %827 = vmatpush1.msra.mxu0 %v50
    %828 = vmatprep.subr.mxu0 0.0
    %829 = vmatpush1.msra.mxu0 %v49
    %830 = vmatprep.subr.mxu0 0.0
    %831 = vmatpush1.msra.mxu0 %v48
    %832 = vmatprep.subr.mxu0 0.0
    %833 = vmatpush1.msra.mxu0 %v47
    %834 = vmatprep.subr.mxu0 0.0
    %835 = vmatpush2.msra.mxu0 0.0
    %836 = vmatprep.subr.mxu0 0.0
    %837 = vmatpush2.msra.mxu0 0.0
    %838 = vmatprep.subr.mxu0 0.0
    %839 = vmatpush2.msra.mxu0 0.0
    %840 = vmatprep.subr.mxu0 0.0
    %841 = vmatpush2.msra.mxu0 0.0
    %842 = vmatprep.subr.mxu0 0.0
    %843 = vmatpush2.msra.mxu0 0.0
    %844 = vmatprep.subr.mxu0 0.0
    %845 = vmatpush2.msra.mxu0 0.0
    %846 = vmatprep.subr.mxu0 0.0
    %847 = vmatpush2.msra.mxu0 0.0
    %848 = vmatprep.subr.mxu0 0.0
    %849 = vmatpush2.msra.mxu0 0.0
    %850 = vmatprep.subr.mxu0 0.0
    %851 = vmatpush2.msra.mxu0 0.0
    %852 = vmatprep.subr.mxu0 0.0
    %853 = vmatpush2.msra.mxu0 0.0
    %854 = vmatprep.subr.mxu0 0.0
    %855 = vmatpush2.msra.mxu0 0.0
    %856 = vmatprep.subr.mxu0 0.0
    %857 = vmatpush2.msra.mxu0 0.0
    %858 = vmatprep.subr.mxu0 0.0
    %859 = vmatpush2.msra.mxu0 0.0
    %860 = vmatprep.subr.mxu0 0.0
    %861 = vmatpush2.msra.mxu0 0.0
    %862 = vmatprep.subr.mxu0 0.0
    %863 = vmatpush2.msra.mxu0 0.0
    %864 = vmatprep.subr.mxu0 0.0
    %865 = vmatpush2.msra.mxu0 0.0
    %866 = vmatprep.mubr.f32.mxu0 0.0
    %867 = vmatmul.mubr.f32.gmra.mxu0 %v800
    %v868 = vpop.f32.mrf.mxu0
    %v869 = vadd.f32 0.0, %v868
    %v870 = vpop.f32.mrf.mxu0
    %871 = vdwg.mxu0
    %v873 = vrot.slane %v869, 2
    %v875 = vadd.f32 %v478, %v873
    %v876 = vxor.u32 %v875, 2147483648
    %v877 = vmul.f32 %v876, 1.442695
    %v878 = vpow.pop %v877
    %v879 = vadd.f32 %v878, 1.0
    %v880 = vrcp.pop %v879
    %v881 = vmul.f32 1.0, %v880
    %v882 = vtanh.pop %v875
    %v884 = vrot.slane %v789, 6
    %v886 = vmul.f32 %v881, %v884
    %888 = vrot.lane.b32.xlu0 %v882, 64
    %v889 = vpop.permute.xlu0 %888
    %v891 = vmul.f32 %v881, %v889
    %893 = vrot.lane.b32.xlu0 %v891, 32
    %v894 = vpop.permute.xlu0 %893
    %v896 = vadd.f32 %v886, %v894
    %v897 = vtanh.pop %v896
    %899 = vrot.lane.b32.xlu0 %v897, 64
    %v900 = vpop.permute.xlu0 %899
    %v902 = vmul.f32 %v881, %v900
    %904 = vrot.lane.b32.xlu0 %v902, 32
    %v905 = vpop.permute.xlu0 %904
    %vm907 = vcmask 261126
    %908 = vst.msk [vmem:[#allocation2 - $0x6] sm:$0xc0] %vm907, %v905
    %910 = vrot.lane.b32.xlu0 %v896, 96
    %v911 = vpop.permute.xlu0 %910
    %913 = vst.msk [vmem:[#allocation3 - $0x6] sm:$0xc0] %vm907, %v911
    // Predicated region
    $region22: #{tpu_custom_call.1} parent=1 // pred_check
      %p914 = pneg %p40
    $region23: #{tpu_custom_call.1} parent=1 // pred_check_branch
      %916 = sbr.rel (%p914) target = $region25
    $region24: #{tpu_custom_call.1} parent=1 // pred_region
      %917 = vst.msk [vmem:[#allocation9 - $0x6] sm:$0xc0] %vm907, %v905
    $region25: #{tpu_custom_call.1} parent=1 // pred_fallthru
      _
    // Predicated region
    $region26: #{tpu_custom_call.1} parent=1 // pred_check
      _
    $region27: #{tpu_custom_call.1} parent=1 // pred_check_branch
      %919 = sbr.rel (0) target = $region29
    $region28: #{tpu_custom_call.1} parent=1 // pred_region
      %s921 = ssub.s32 32, 32
      %922 = vsyncadd [#allocation6], %s921
      %s924 = sshll.u32 [#allocation9], 4
      %s925 = int_to_ptr.vmem [resolvable:$true] %s924
      %927 = dma.vmem_to_hbm [thread:$0]  %s925, 32, %s2, [#allocation6]
    $region29: #{tpu_custom_call.1} parent=1 // pred_fallthru
      _
    // Predicated region
    $region30: #{tpu_custom_call.1} parent=1 // pred_check
      _
    $region31: #{tpu_custom_call.1} parent=1 // pred_check_branch
      %929 = sbr.rel (0) target = $region33
    $region32: #{tpu_custom_call.1} parent=1 // pred_region
      %930 = dma.done [#allocation6], 32
    $region33: #{tpu_custom_call.1} parent=1 // pred_fallthru
      _
    %931 = vsyncpa [#allocation5], 1
    %932 = vsyncpa [#allocation8], 1
    %933 = vsyncpa [#allocation6], 1

</llo_original>
